<compile_context>
chip_gen: v6e
topology: v6e:2x2x1
jax: 0.10.0
libtpu: 0.0.40
codegen_flags: <defaults>
</compile_context>

<pallas_src>
import jax
import jax.numpy as jnp
from jax.experimental import pallas as pl
from jax.experimental.pallas import tpu as pltpu

LANE = 128       # lane width; batch is padded/tiled in multiples of this
D_IN = 13        # real input features
D_OUT = 2        # real output logits
D_HID = 100      # real hidden width
SUB_IN = 16      # padded input-feature rows  (one bf16 sublane tile)
SUB_OUT = 8      # padded output-logit rows   (one f32 sublane tile)
HID = 128        # padded hidden width


def _round_up(x, m):
    return (x + m - 1) // m * m


def _mlp_kernel(xt_ref, w1t_ref, b1_ref, w2t_ref, b2_ref, w3t_ref, b3_ref,
                ot_ref):
    # Layer 1: (128,16) @ (16,tile_b) -> (128,tile_b); f32 accum, bias+ReLU.
    h1 = jnp.dot(w1t_ref[...], xt_ref[...], preferred_element_type=jnp.float32)
    h1 = jnp.maximum(h1 + b1_ref[...], 0.0)
    # Layer 2: (128,128) @ (128,tile_b).
    h2 = jnp.dot(w2t_ref[...], h1.astype(w2t_ref.dtype),
                 preferred_element_type=jnp.float32)
    h2 = jnp.maximum(h2 + b2_ref[...], 0.0)
    # Layer 3 (logits, no activation): (8,128) @ (128,tile_b) -> (8,tile_b).
    out = jnp.dot(w3t_ref[...], h2.astype(w3t_ref.dtype),
                  preferred_element_type=jnp.float32) + b3_ref[...]
    ot_ref[...] = out.astype(ot_ref.dtype)


def heart_disease_nn(x, padded_params, *, max_tile_b=1024):
    """Fused forward pass. x: (B, 13) float32 -> (B, 2) float32 logits."""
    w1t, b1, w2t, b2, w3t, b3 = padded_params
    B = x.shape[0]

    # Batch lives on lanes -> pad to a multiple of 128 and pick a lane-dense
    # tile.  When more than one tile is needed, target >= 2 grid steps so the
    # "parallel" axis can shard across both v7x TensorCores.
    b_pad = _round_up(B, LANE)
    tile_b = min(max_tile_b, max(LANE, _round_up(pl.cdiv(b_pad, 2), LANE)))
    b_pad = _round_up(b_pad, tile_b)
    n_tiles = b_pad // tile_b

    # (B,13) f32 -> (16, b_pad) bf16, batch on lanes.  Single cast+T+pad chain
    # (one XLA fusion) instead of zeros + scatter.
    xt = jnp.pad(x.astype(jnp.bfloat16).T,
                 ((0, SUB_IN - D_IN), (0, b_pad - B)))

    const = lambda shape: pl.BlockSpec(shape, lambda i: (0, 0))

    flops = 2 * b_pad * (SUB_IN * HID + HID * HID + HID * SUB_OUT)
    bytes_accessed = (SUB_IN * b_pad * 2                              # xt bf16
                      + SUB_OUT * b_pad * 4                           # out f32
                      + (HID * SUB_IN + HID * HID + SUB_OUT * HID) * 2  # weights
                      + (2 * HID + SUB_OUT) * 4)                      # biases

    out_t = pl.pallas_call(
        _mlp_kernel,
        out_shape=jax.ShapeDtypeStruct((SUB_OUT, b_pad), jnp.float32),
        grid=(n_tiles,),
        in_specs=[
            pl.BlockSpec((SUB_IN, tile_b), lambda i: (0, i)),  # xt streams
            const((HID, SUB_IN)),      # w1t resident in VMEM
            const((HID, 1)),           # b1
            const((HID, HID)),         # w2t
            const((HID, 1)),           # b2
            const((SUB_OUT, HID)),     # w3t
            const((SUB_OUT, 1)),       # b3
        ],
        out_specs=pl.BlockSpec((SUB_OUT, tile_b), lambda i: (0, i)),
        compiler_params=pltpu.CompilerParams(
            dimension_semantics=("parallel",)),
        cost_estimate=pl.CostEstimate(
            flops=flops, transcendentals=0, bytes_accessed=bytes_accessed),
    )(xt, w1t, b1, w2t, b2, w3t, b3)

    # (8, b_pad) -> (B, 2) real logits.
    return out_t[:D_OUT, :B].T


def init_params(key):
    """Deterministic init mimicking torch.nn.Linear (uniform +/- 1/sqrt(fan_in))."""
    dims = [(D_IN, D_HID), (D_HID, D_HID), (D_HID, D_OUT)]
    params = []
    for i, (fan_in, fan_out) in enumerate(dims):
        kw, kb = jax.random.split(jax.random.fold_in(key, i))
        bound = 1.0 / jnp.sqrt(float(fan_in))
        w = jax.random.uniform(kw, (fan_in, fan_out), jnp.float32, -bound, bound)
        b = jax.random.uniform(kb, (fan_out,), jnp.float32, -bound, bound)
        params += [w, b]
    return tuple(params)


def prepare_params(params):
    """Transpose weights to (out, in), zero-pad to sublane/lane tiles.

    Weights -> bf16 (MXU operands); biases stay f32 column vectors (VPU epilogue).
    """
    w1, b1, w2, b2, w3, b3 = params

    def pad_t(w, rows, cols):     # (in, out) -> (out_pad, in_pad)
        wt = w.T
        return jnp.pad(wt, ((0, rows - wt.shape[0]), (0, cols - wt.shape[1])))

    def pad_col(b, rows):         # (out,) -> (out_pad, 1)
        return jnp.pad(b[:, None], ((0, rows - b.shape[0]), (0, 0)))

    return (pad_t(w1, HID, SUB_IN).astype(jnp.bfloat16),
            pad_col(b1, HID),
            pad_t(w2, HID, HID).astype(jnp.bfloat16),
            pad_col(b2, HID),
            pad_t(w3, SUB_OUT, HID).astype(jnp.bfloat16),
            pad_col(b3, SUB_OUT))


def ref_forward(x, padded_params):
    """Plain-JAX reference using the same padded, transposed, bf16 dataflow."""
    w1t, b1, w2t, b2, w3t, b3 = padded_params
    xt = jnp.pad(x.astype(jnp.bfloat16).T, ((0, SUB_IN - D_IN), (0, 0)))
    h1 = jnp.maximum(
        jnp.dot(w1t, xt, preferred_element_type=jnp.float32) + b1, 0.0)
    h2 = jnp.maximum(
        jnp.dot(w2t, h1.astype(jnp.bfloat16),
                preferred_element_type=jnp.float32) + b2, 0.0)
    out = jnp.dot(w3t, h2.astype(jnp.bfloat16),
                  preferred_element_type=jnp.float32) + b3
    return out[:D_OUT, :].T


if __name__ == "__main__":
    key = jax.random.PRNGKey(0)
    params = init_params(key)
    padded_params = prepare_params(params)

    # batch=8 samples with 13 features each (heart-disease tabular input)
    x = jax.random.normal(jax.random.fold_in(key, 100), (8, D_IN), jnp.float32)

    out = heart_disease_nn(x, padded_params)
    out = jax.block_until_ready(out)

    ref = ref_forward(x, padded_params)
    assert out.shape == (8, D_OUT), out.shape
    assert jnp.allclose(out, ref, atol=1e-4, rtol=1e-4), (
        f"max abs err {jnp.max(jnp.abs(out - ref))}")

    print("KERNEL_OK")
</pallas_src>

<mosaic_0001>
module attributes {stable_mosaic.version = 11 : i64} {
  func.func @_mlp_kernel(%arg0: i32, %arg1: memref<16x128xbf16, #tpu.memory_space<vmem>>, %arg2: memref<128x16xbf16, #tpu.memory_space<vmem>>, %arg3: memref<128x1xf32, #tpu.memory_space<vmem>>, %arg4: memref<128x128xbf16, #tpu.memory_space<vmem>>, %arg5: memref<128x1xf32, #tpu.memory_space<vmem>>, %arg6: memref<8x128xbf16, #tpu.memory_space<vmem>>, %arg7: memref<8x1xf32, #tpu.memory_space<vmem>>, %arg8: memref<8x128xf32, #tpu.memory_space<vmem>>) attributes {dimension_semantics = [#tpu.dimension_semantics<parallel>], iteration_bounds = array<i64: 1>, scalar_prefetch = 0 : i64, scratch_operands = 0 : i64, tpu.core_type = #tpu.core_type<tc>, window_params = [{transform_indices = @transform_0, window_bounds = array<i64: 16, 128>}, {pipeline_mode = #tpu.pipeline_mode<synchronous>, transform_indices = @transform_1, window_bounds = array<i64: 128, 16>}, {pipeline_mode = #tpu.pipeline_mode<synchronous>, transform_indices = @transform_2, window_bounds = array<i64: 128, 1>}, {pipeline_mode = #tpu.pipeline_mode<synchronous>, transform_indices = @transform_3, window_bounds = array<i64: 128, 128>}, {pipeline_mode = #tpu.pipeline_mode<synchronous>, transform_indices = @transform_4, window_bounds = array<i64: 128, 1>}, {pipeline_mode = #tpu.pipeline_mode<synchronous>, transform_indices = @transform_5, window_bounds = array<i64: 8, 128>}, {pipeline_mode = #tpu.pipeline_mode<synchronous>, transform_indices = @transform_6, window_bounds = array<i64: 8, 1>}, {transform_indices = @transform_7, window_bounds = array<i64: 8, 128>}]} {
    %c0 = arith.constant 0 : index
    %c0_0 = arith.constant 0 : index
    %0 = vector.load %arg2[%c0, %c0_0] : memref<128x16xbf16, #tpu.memory_space<vmem>>, vector<128x16xbf16>
    %c0_1 = arith.constant 0 : index
    %c0_2 = arith.constant 0 : index
    %1 = vector.load %arg1[%c0_1, %c0_2] : memref<16x128xbf16, #tpu.memory_space<vmem>>, vector<16x128xbf16>
    %cst = arith.constant dense<0.000000e+00> : vector<128x128xf32>
    %2 = tpu.matmul %0, %1, %cst {dimension_numbers = #tpu.dot_dimension_numbers<[1], [0], [0], [1], [0, 0, 1, 1], [], []>} : vector<128x16xbf16>, vector<16x128xbf16>, vector<128x128xf32> -> vector<128x128xf32>
    %c0_3 = arith.constant 0 : index
    %c0_4 = arith.constant 0 : index
    %3 = vector.load %arg3[%c0_3, %c0_4] : memref<128x1xf32, #tpu.memory_space<vmem>>, vector<128x1xf32>
    %4 = vector.broadcast %3 : vector<128x1xf32> to vector<128x128xf32>
    %5 = arith.addf %2, %4 : vector<128x128xf32>
    %cst_5 = arith.constant 0.000000e+00 : f32
    %6 = vector.broadcast %cst_5 : f32 to vector<128x128xf32>
    %7 = arith.maximumf %5, %6 : vector<128x128xf32>
    %c0_6 = arith.constant 0 : index
    %c0_7 = arith.constant 0 : index
    %8 = vector.load %arg4[%c0_6, %c0_7] : memref<128x128xbf16, #tpu.memory_space<vmem>>, vector<128x128xbf16>
    %9 = arith.truncf %7 : vector<128x128xf32> to vector<128x128xbf16>
    %cst_8 = arith.constant dense<0.000000e+00> : vector<128x128xf32>
    %10 = tpu.matmul %8, %9, %cst_8 {dimension_numbers = #tpu.dot_dimension_numbers<[1], [0], [0], [1], [0, 0, 1, 1], [], []>} : vector<128x128xbf16>, vector<128x128xbf16>, vector<128x128xf32> -> vector<128x128xf32>
    %c0_9 = arith.constant 0 : index
    %c0_10 = arith.constant 0 : index
    %11 = vector.load %arg5[%c0_9, %c0_10] : memref<128x1xf32, #tpu.memory_space<vmem>>, vector<128x1xf32>
    %12 = vector.broadcast %11 : vector<128x1xf32> to vector<128x128xf32>
    %13 = arith.addf %10, %12 : vector<128x128xf32>
    %cst_11 = arith.constant 0.000000e+00 : f32
    %14 = vector.broadcast %cst_11 : f32 to vector<128x128xf32>
    %15 = arith.maximumf %13, %14 : vector<128x128xf32>
    %c0_12 = arith.constant 0 : index
    %c0_13 = arith.constant 0 : index
    %16 = vector.load %arg6[%c0_12, %c0_13] : memref<8x128xbf16, #tpu.memory_space<vmem>>, vector<8x128xbf16>
    %17 = arith.truncf %15 : vector<128x128xf32> to vector<128x128xbf16>
    %cst_14 = arith.constant dense<0.000000e+00> : vector<8x128xf32>
    %18 = tpu.matmul %16, %17, %cst_14 {dimension_numbers = #tpu.dot_dimension_numbers<[1], [0], [0], [1], [0, 0, 1, 1], [], []>} : vector<8x128xbf16>, vector<128x128xbf16>, vector<8x128xf32> -> vector<8x128xf32>
    %c0_15 = arith.constant 0 : index
    %c0_16 = arith.constant 0 : index
    %19 = vector.load %arg7[%c0_15, %c0_16] : memref<8x1xf32, #tpu.memory_space<vmem>>, vector<8x1xf32>
    %20 = vector.broadcast %19 : vector<8x1xf32> to vector<8x128xf32>
    %21 = arith.addf %18, %20 : vector<8x128xf32>
    %c0_17 = arith.constant 0 : index
    %c0_18 = arith.constant 0 : index
    %22 = vector.load %arg8[%c0_17, %c0_18] : memref<8x128xf32, #tpu.memory_space<vmem>>, vector<8x128xf32>
    tpu.vector_store %arg8[%c0_17, %c0_18], %21 {strides = array<i32>} : memref<8x128xf32, #tpu.memory_space<vmem>>, vector<8x128xf32>,
    return
  }
  func.func @transform_0(%arg0: i32) -> (i32, i32) {
    %c0_i32 = arith.constant 0 : i32
    %c0_i32_0 = arith.constant 0 : i32
    return %c0_i32, %arg0 : i32, i32
  }
  func.func @transform_1(%arg0: i32) -> (i32, i32) {
    %c0_i32 = arith.constant 0 : i32
    %c0_i32_0 = arith.constant 0 : i32
    %c0_i32_1 = arith.constant 0 : i32
    return %c0_i32, %c0_i32_0 : i32, i32
  }
  func.func @transform_2(%arg0: i32) -> (i32, i32) {
    %c0_i32 = arith.constant 0 : i32
    %c0_i32_0 = arith.constant 0 : i32
    %c0_i32_1 = arith.constant 0 : i32
    return %c0_i32, %c0_i32_0 : i32, i32
  }
  func.func @transform_3(%arg0: i32) -> (i32, i32) {
    %c0_i32 = arith.constant 0 : i32
    %c0_i32_0 = arith.constant 0 : i32
    %c0_i32_1 = arith.constant 0 : i32
    return %c0_i32, %c0_i32_0 : i32, i32
  }
  func.func @transform_4(%arg0: i32) -> (i32, i32) {
    %c0_i32 = arith.constant 0 : i32
    %c0_i32_0 = arith.constant 0 : i32
    %c0_i32_1 = arith.constant 0 : i32
    return %c0_i32, %c0_i32_0 : i32, i32
  }
  func.func @transform_5(%arg0: i32) -> (i32, i32) {
    %c0_i32 = arith.constant 0 : i32
    %c0_i32_0 = arith.constant 0 : i32
    %c0_i32_1 = arith.constant 0 : i32
    return %c0_i32, %c0_i32_0 : i32, i32
  }
  func.func @transform_6(%arg0: i32) -> (i32, i32) {
    %c0_i32 = arith.constant 0 : i32
    %c0_i32_0 = arith.constant 0 : i32
    %c0_i32_1 = arith.constant 0 : i32
    return %c0_i32, %c0_i32_0 : i32, i32
  }
  func.func @transform_7(%arg0: i32) -> (i32, i32) {
    %c0_i32 = arith.constant 0 : i32
    %c0_i32_0 = arith.constant 0 : i32
    return %c0_i32, %arg0 : i32, i32
  }
}

</mosaic_0001>

<llo_original>
// kernel: tpu_custom_call.1
$region0: #{tpu_custom_call.1}
  #allocation0 [shape = 'u32[]', space=smem, size = 0x4, offset = 0x4, fixed_abs, tag = 'smem constant byte address 0x4 - core index']
  #allocation1 [shape = 'u32[144,128]{1,0:T(1,128)}', space=vmem, size = 0x12000, scoped, tag = 'internal scratch']
  %s0 = inlined_call_operand.vmem [shape: bf16[16,128], index: 0, kind: input, shape index: {}]
  %s1 = inlined_call_operand.vmem [shape: bf16[128,16], index: 1, kind: input, shape index: {}]
  %s2 = inlined_call_operand.vmem [shape: f32[128,1], index: 2, kind: input, shape index: {}]
  %s3 = inlined_call_operand.vmem [shape: bf16[128,128], index: 3, kind: input, shape index: {}]
  %s4 = inlined_call_operand.vmem [shape: f32[128,1], index: 4, kind: input, shape index: {}]
  %s5 = inlined_call_operand.vmem [shape: bf16[8,128], index: 5, kind: input, shape index: {}]
  %s6 = inlined_call_operand.vmem [shape: f32[8,1], index: 6, kind: input, shape index: {}]
  %s7 = inlined_call_operand.hbm [shape: f32[8,128], index: 7, kind: output, shape index: {}]
  %s8 = sld [smem:[#allocation0]]
  $region38: #{tpu_custom_call.1} parent=0
    _
  %s10 = ssub.s32 1, %s8
  %s11 = scalar_select 0, %s10, %s8
  $region1: #{tpu_custom_call.1} parent=0
    #allocation2 [shape = 'u8[4096]{0}', space=vmem, size = 0x1000, scoped, tag = 'output window, operand 0, single buffered']
    #allocation3 [shape = 's32[1]{0}', space=sflag, size = 0x4, scoped, tag = 'scoped memory for tpu_custom_call.1']
    %12 = vsyncpa [#allocation3], 0
    // Predicated region
    $region2: #{tpu_custom_call.1} parent=1 // pred_check
      _
    $region3: #{tpu_custom_call.1} parent=1 // pred_check_branch
      %14 = sbr.rel (0) target = $region5
    $region4: #{tpu_custom_call.1} parent=1 // pred_region
      _
    $region5: #{tpu_custom_call.1} parent=1 // pred_fallthru
      _
    // Predicated region
    $region6: #{tpu_custom_call.1} parent=1 // pred_check
      _
    $region7: #{tpu_custom_call.1} parent=1 // pred_check_branch
      %16 = sbr.rel (0) target = $region9
    $region8: #{tpu_custom_call.1} parent=1 // pred_region
      _
    $region9: #{tpu_custom_call.1} parent=1 // pred_fallthru
      _
    // Predicated region
    $region10: #{tpu_custom_call.1} parent=1 // pred_check
      _
    $region11: #{tpu_custom_call.1} parent=1 // pred_check_branch
      %18 = sbr.rel (0) target = $region13
    $region12: #{tpu_custom_call.1} parent=1 // pred_region
      _
    $region13: #{tpu_custom_call.1} parent=1 // pred_fallthru
      _
    // Predicated region
    $region14: #{tpu_custom_call.1} parent=1 // pred_check
      _
    $region15: #{tpu_custom_call.1} parent=1 // pred_check_branch
      %20 = sbr.rel (0) target = $region17
    $region16: #{tpu_custom_call.1} parent=1 // pred_region
      _
    $region17: #{tpu_custom_call.1} parent=1 // pred_fallthru
      _
    // Predicated region
    $region18: #{tpu_custom_call.1} parent=1 // pred_check
      _
    $region19: #{tpu_custom_call.1} parent=1 // pred_check_branch
      %22 = sbr.rel (0) target = $region21
    $region20: #{tpu_custom_call.1} parent=1 // pred_region
      _
    $region21: #{tpu_custom_call.1} parent=1 // pred_fallthru
      _
    // Predicated region
    $region22: #{tpu_custom_call.1} parent=1 // pred_check
      _
    $region23: #{tpu_custom_call.1} parent=1 // pred_check_branch
      %24 = sbr.rel (0) target = $region25
    $region24: #{tpu_custom_call.1} parent=1 // pred_region
      _
    $region25: #{tpu_custom_call.1} parent=1 // pred_fallthru
      _
    // Predicated region
    $region26: #{tpu_custom_call.1} parent=1 // pred_check
      _
    $region27: #{tpu_custom_call.1} parent=1 // pred_check_branch
      %26 = sbr.rel (0) target = $region29
    $region28: #{tpu_custom_call.1} parent=1 // pred_region
      _
    $region29: #{tpu_custom_call.1} parent=1 // pred_fallthru
      _
    %v28 = vld [vmem:[%s1] sm:$0xf]
    %v29 = vld [vmem:[%s1 + $0x4] sm:$0xf]
    %v30 = vld [vmem:[%s1 + $0x8] sm:$0xf]
    %v31 = vld [vmem:[%s1 + $0xc] sm:$0xf]
    %v32 = vld [vmem:[%s1 + $0x10] sm:$0xf]
    %v33 = vld [vmem:[%s1 + $0x14] sm:$0xf]
    %v34 = vld [vmem:[%s1 + $0x18] sm:$0xf]
    %v35 = vld [vmem:[%s1 + $0x1c] sm:$0xf]
    %v36 = vld [vmem:[%s1 + $0x20] sm:$0xf]
    %v37 = vld [vmem:[%s1 + $0x24] sm:$0xf]
    %v38 = vld [vmem:[%s1 + $0x28] sm:$0xf]
    %v39 = vld [vmem:[%s1 + $0x2c] sm:$0xf]
    %v40 = vld [vmem:[%s1 + $0x30] sm:$0xf]
    %v41 = vld [vmem:[%s1 + $0x34] sm:$0xf]
    %v42 = vld [vmem:[%s1 + $0x38] sm:$0xf]
    %v43 = vld [vmem:[%s1 + $0x3c] sm:$0xf]
    %v44 = vld [vmem:[%s0] sm:$0xf]
    %v45 = vld [vmem:[%s0 + $0x4] sm:$0xf]
    %v46 = vld [vmem:[%s2] sm:$0xff]
    %v47 = vld [vmem:[%s2 + $0x8] sm:$0xff]
    %v48 = vld [vmem:[%s2 + $0x10] sm:$0xff]
    %v49 = vld [vmem:[%s2 + $0x18] sm:$0xff]
    %v50 = vld [vmem:[%s2 + $0x20] sm:$0xff]
    %v51 = vld [vmem:[%s2 + $0x28] sm:$0xff]
    %v52 = vld [vmem:[%s2 + $0x30] sm:$0xff]
    %v53 = vld [vmem:[%s2 + $0x38] sm:$0xff]
    %v54 = vld [vmem:[%s2 + $0x40] sm:$0xff]
    %v55 = vld [vmem:[%s2 + $0x48] sm:$0xff]
    %v56 = vld [vmem:[%s2 + $0x50] sm:$0xff]
    %v57 = vld [vmem:[%s2 + $0x58] sm:$0xff]
    %v58 = vld [vmem:[%s2 + $0x60] sm:$0xff]
    %v59 = vld [vmem:[%s2 + $0x68] sm:$0xff]
    %v60 = vld [vmem:[%s2 + $0x70] sm:$0xff]
    %v61 = vld [vmem:[%s2 + $0x78] sm:$0xff]
    %63 = vset.pattern.permute.xlu0 0
    %64 = vperm.xlu0 %63, %v46
    %v65 = vpop.permute.xlu0 %64
    %68 = vset.pattern.permute.xlu0 0
    %69 = vperm.xlu0 %68, %v47
    %v70 = vpop.permute.xlu0 %69
    %73 = vset.pattern.permute.xlu0 0
    %74 = vperm.xlu0 %73, %v48
    %v75 = vpop.permute.xlu0 %74
    %78 = vset.pattern.permute.xlu0 0
    %79 = vperm.xlu0 %78, %v49
    %v80 = vpop.permute.xlu0 %79
    %83 = vset.pattern.permute.xlu0 0
    %84 = vperm.xlu0 %83, %v50
    %v85 = vpop.permute.xlu0 %84
    %88 = vset.pattern.permute.xlu0 0
    %89 = vperm.xlu0 %88, %v51
    %v90 = vpop.permute.xlu0 %89
    %93 = vset.pattern.permute.xlu0 0
    %94 = vperm.xlu0 %93, %v52
    %v95 = vpop.permute.xlu0 %94
    %98 = vset.pattern.permute.xlu0 0
    %99 = vperm.xlu0 %98, %v53
    %v100 = vpop.permute.xlu0 %99
    %103 = vset.pattern.permute.xlu0 0
    %104 = vperm.xlu0 %103, %v54
    %v105 = vpop.permute.xlu0 %104
    %108 = vset.pattern.permute.xlu0 0
    %109 = vperm.xlu0 %108, %v55
    %v110 = vpop.permute.xlu0 %109
    %113 = vset.pattern.permute.xlu0 0
    %114 = vperm.xlu0 %113, %v56
    %v115 = vpop.permute.xlu0 %114
    %118 = vset.pattern.permute.xlu0 0
    %119 = vperm.xlu0 %118, %v57
    %v120 = vpop.permute.xlu0 %119
    %123 = vset.pattern.permute.xlu0 0
    %124 = vperm.xlu0 %123, %v58
    %v125 = vpop.permute.xlu0 %124
    %128 = vset.pattern.permute.xlu0 0
    %129 = vperm.xlu0 %128, %v59
    %v130 = vpop.permute.xlu0 %129
    %133 = vset.pattern.permute.xlu0 0
    %134 = vperm.xlu0 %133, %v60
    %v135 = vpop.permute.xlu0 %134
    %138 = vset.pattern.permute.xlu0 0
    %139 = vperm.xlu0 %138, %v61
    %v140 = vpop.permute.xlu0 %139
    %v158 = vunpack.c.l.b16 %v28
    %v159 = vunpack.c.l.b16 %v29
    %v160 = vunpack.c.l.b16 %v30
    %v161 = vunpack.c.l.b16 %v31
    %v162 = vunpack.c.l.b16 %v32
    %v163 = vunpack.c.l.b16 %v33
    %v164 = vunpack.c.l.b16 %v34
    %v165 = vunpack.c.l.b16 %v35
    %v166 = vunpack.c.l.b16 %v36
    %v167 = vunpack.c.l.b16 %v37
    %v168 = vunpack.c.l.b16 %v38
    %v169 = vunpack.c.l.b16 %v39
    %v170 = vunpack.c.l.b16 %v40
    %v171 = vunpack.c.l.b16 %v41
    %v172 = vunpack.c.l.b16 %v42
    %v173 = vunpack.c.l.b16 %v43
    %v174 = vpack.c.b16 %v159, %v158
    %v175 = vpack.c.b16 %v161, %v160
    %v176 = vpack.c.b16 %v163, %v162
    %v177 = vpack.c.b16 %v165, %v164
    %v178 = vpack.c.b16 %v167, %v166
    %v179 = vpack.c.b16 %v169, %v168
    %v180 = vpack.c.b16 %v171, %v170
    %v181 = vpack.c.b16 %v173, %v172
    %v184 = vunpack.c.l.b16 %v44
    %v185 = vunpack.c.l.b16 %v45
    %v186 = vpack.c.b16 %v185, %v184
    %vm188 = vcmask 130048
    %v190 = vsel %vm188, %v174, 0
    %v193 = vsel %vm188, %v175, 0
    %v196 = vsel %vm188, %v176, 0
    %v199 = vsel %vm188, %v177, 0
    %v202 = vsel %vm188, %v178, 0
    %v205 = vsel %vm188, %v179, 0
    %v208 = vsel %vm188, %v180, 0
    %v211 = vsel %vm188, %v181, 0
    %213 = vmatprep.subr.bf16.mxu0 0
    %214 = vmatpush1.bf16.msra.mxu0 0
    %215 = vmatprep.subr.bf16.mxu0 0
    %216 = vmatpush1.bf16.msra.mxu0 0
    %217 = vmatprep.subr.bf16.mxu0 0
    %218 = vmatpush1.bf16.msra.mxu0 0
    %219 = vmatprep.subr.bf16.mxu0 0
    %220 = vmatpush1.bf16.msra.mxu0 0
    %221 = vmatprep.subr.bf16.mxu0 0
    %222 = vmatpush1.bf16.msra.mxu0 0
    %223 = vmatprep.subr.bf16.mxu0 0
    %224 = vmatpush1.bf16.msra.mxu0 0
    %225 = vmatprep.subr.bf16.mxu0 0
    %226 = vmatpush1.bf16.msra.mxu0 0
    %227 = vmatprep.subr.bf16.mxu0 0
    %228 = vmatpush1.bf16.msra.mxu0 %v186
    %229 = vmatprep.subr.bf16.mxu0 0
    %230 = vmatpush2.bf16.msra.mxu0 0
    %231 = vmatprep.subr.bf16.mxu0 0
    %232 = vmatpush2.bf16.msra.mxu0 0
    %233 = vmatprep.subr.bf16.mxu0 0
    %234 = vmatpush2.bf16.msra.mxu0 0
    %235 = vmatprep.subr.bf16.mxu0 0
    %236 = vmatpush2.bf16.msra.mxu0 0
    %237 = vmatprep.subr.bf16.mxu0 0
    %238 = vmatpush2.bf16.msra.mxu0 0
    %239 = vmatprep.subr.bf16.mxu0 0
    %240 = vmatpush2.bf16.msra.mxu0 0
    %241 = vmatprep.subr.bf16.mxu0 0
    %242 = vmatpush2.bf16.msra.mxu0 0
    %243 = vmatprep.subr.bf16.mxu0 0
    %244 = vmatpush2.bf16.msra.mxu0 0
    %245 = vmatprep.mubr.bf16.mxu0 0
    %246 = vmatmul.mubr.bf16.gmra.mxu0 %v190
    %v247 = vpop.f32.mrf.mxu0
    %v248 = vadd.f32 %v65, %v247
    %v249 = vpop.f32.mrf.mxu0
    %v250 = vpop.f32.mrf.mxu0
    %v251 = vadd.f32 %v70, %v250
    %v252 = vpop.f32.mrf.mxu0
    %253 = vmatprep.mubr.bf16.mxu0 0
    %254 = vmatmul.mubr.bf16.gmra.mxu0 %v193
    %v255 = vpop.f32.mrf.mxu0
    %v256 = vadd.f32 %v75, %v255
    %v257 = vpop.f32.mrf.mxu0
    %v258 = vpop.f32.mrf.mxu0
    %v259 = vadd.f32 %v80, %v258
    %v260 = vpop.f32.mrf.mxu0
    %261 = vmatprep.mubr.bf16.mxu0 0
    %262 = vmatmul.mubr.bf16.gmra.mxu0 %v196
    %v263 = vpop.f32.mrf.mxu0
    %v264 = vadd.f32 %v85, %v263
    %v265 = vpop.f32.mrf.mxu0
    %v266 = vpop.f32.mrf.mxu0
    %v267 = vadd.f32 %v90, %v266
    %v268 = vpop.f32.mrf.mxu0
    %269 = vmatprep.mubr.bf16.mxu0 0
    %270 = vmatmul.mubr.bf16.gmra.mxu0 %v199
    %v271 = vpop.f32.mrf.mxu0
    %v272 = vadd.f32 %v95, %v271
    %v273 = vpop.f32.mrf.mxu0
    %v274 = vpop.f32.mrf.mxu0
    %v275 = vadd.f32 %v100, %v274
    %v276 = vpop.f32.mrf.mxu0
    %277 = vmatprep.mubr.bf16.mxu0 0
    %278 = vmatmul.mubr.bf16.gmra.mxu0 %v202
    %v279 = vpop.f32.mrf.mxu0
    %v280 = vadd.f32 %v105, %v279
    %v281 = vpop.f32.mrf.mxu0
    %v282 = vpop.f32.mrf.mxu0
    %v283 = vadd.f32 %v110, %v282
    %v284 = vpop.f32.mrf.mxu0
    %285 = vmatprep.mubr.bf16.mxu0 0
    %286 = vmatmul.mubr.bf16.gmra.mxu0 %v205
    %v287 = vpop.f32.mrf.mxu0
    %v288 = vadd.f32 %v115, %v287
    %v289 = vpop.f32.mrf.mxu0
    %v290 = vpop.f32.mrf.mxu0
    %v291 = vadd.f32 %v120, %v290
    %v292 = vpop.f32.mrf.mxu0
    %293 = vmatprep.mubr.bf16.mxu0 0
    %294 = vmatmul.mubr.bf16.gmra.mxu0 %v208
    %v295 = vpop.f32.mrf.mxu0
    %v296 = vadd.f32 %v125, %v295
    %v297 = vpop.f32.mrf.mxu0
    %v298 = vpop.f32.mrf.mxu0
    %v299 = vadd.f32 %v130, %v298
    %v300 = vpop.f32.mrf.mxu0
    %301 = vmatprep.mubr.bf16.mxu0 0
    %302 = vmatmul.mubr.bf16.gmra.mxu0 %v211
    %v303 = vpop.f32.mrf.mxu0
    %v304 = vadd.f32 %v135, %v303
    %v305 = vpop.f32.mrf.mxu0
    %v306 = vpop.f32.mrf.mxu0
    %v307 = vadd.f32 %v140, %v306
    %v308 = vpop.f32.mrf.mxu0
    %309 = vdwg.mxu0
    %v310 = vmax.f32 %v248, 0.0
    %v311 = vmax.f32 %v251, 0.0
    %v312 = vmax.f32 %v256, 0.0
    %v313 = vmax.f32 %v259, 0.0
    %v314 = vmax.f32 %v264, 0.0
    %v315 = vmax.f32 %v267, 0.0
    %v316 = vmax.f32 %v272, 0.0
    %v317 = vmax.f32 %v275, 0.0
    %v318 = vmax.f32 %v280, 0.0
    %v319 = vmax.f32 %v283, 0.0
    %v320 = vmax.f32 %v288, 0.0
    %v321 = vmax.f32 %v291, 0.0
    %v322 = vmax.f32 %v296, 0.0
    %v323 = vmax.f32 %v299, 0.0
    %v324 = vmax.f32 %v304, 0.0
    %v325 = vmax.f32 %v307, 0.0
    %v326 = vld [vmem:[%s3] sm:$0xf]
    %v327 = vld [vmem:[%s3 + $0x4] sm:$0xf]
    %v328 = vld [vmem:[%s3 + $0x8] sm:$0xf]
    %v329 = vld [vmem:[%s3 + $0xc] sm:$0xf]
    %v330 = vld [vmem:[%s3 + $0x10] sm:$0xf]
    %v331 = vld [vmem:[%s3 + $0x14] sm:$0xf]
    %v332 = vld [vmem:[%s3 + $0x18] sm:$0xf]
    %v333 = vld [vmem:[%s3 + $0x1c] sm:$0xf]
    %v334 = vld [vmem:[%s3 + $0x20] sm:$0xf]
    %v335 = vld [vmem:[%s3 + $0x24] sm:$0xf]
    %v336 = vld [vmem:[%s3 + $0x28] sm:$0xf]
    %v337 = vld [vmem:[%s3 + $0x2c] sm:$0xf]
    %v338 = vld [vmem:[%s3 + $0x30] sm:$0xf]
    %v339 = vld [vmem:[%s3 + $0x34] sm:$0xf]
    %v340 = vld [vmem:[%s3 + $0x38] sm:$0xf]
    %v341 = vld [vmem:[%s3 + $0x3c] sm:$0xf]
    %v342 = vpack.c.bf16 %v311, %v310
    %v343 = vpack.c.bf16 %v313, %v312
    %v344 = vpack.c.bf16 %v315, %v314
    %v345 = vpack.c.bf16 %v317, %v316
    %v346 = vpack.c.bf16 %v319, %v318
    %v347 = vpack.c.bf16 %v321, %v320
    %v348 = vpack.c.bf16 %v323, %v322
    %v349 = vpack.c.bf16 %v325, %v324
    %v350 = vld [vmem:[%s4] sm:$0xff]
    %v351 = vld [vmem:[%s4 + $0x8] sm:$0xff]
    %v352 = vld [vmem:[%s4 + $0x10] sm:$0xff]
    %v353 = vld [vmem:[%s4 + $0x18] sm:$0xff]
    %v354 = vld [vmem:[%s4 + $0x20] sm:$0xff]
    %v355 = vld [vmem:[%s4 + $0x28] sm:$0xff]
    %v356 = vld [vmem:[%s4 + $0x30] sm:$0xff]
    %v357 = vld [vmem:[%s4 + $0x38] sm:$0xff]
    %v358 = vld [vmem:[%s4 + $0x40] sm:$0xff]
    %v359 = vld [vmem:[%s4 + $0x48] sm:$0xff]
    %v360 = vld [vmem:[%s4 + $0x50] sm:$0xff]
    %v361 = vld [vmem:[%s4 + $0x58] sm:$0xff]
    %v362 = vld [vmem:[%s4 + $0x60] sm:$0xff]
    %v363 = vld [vmem:[%s4 + $0x68] sm:$0xff]
    %v364 = vld [vmem:[%s4 + $0x70] sm:$0xff]
    %v365 = vld [vmem:[%s4 + $0x78] sm:$0xff]
    %367 = vset.pattern.permute.xlu0 0
    %368 = vperm.xlu0 %367, %v350
    %v369 = vpop.permute.xlu0 %368
    %372 = vset.pattern.permute.xlu0 0
    %373 = vperm.xlu0 %372, %v351
    %v374 = vpop.permute.xlu0 %373
    %377 = vset.pattern.permute.xlu0 0
    %378 = vperm.xlu0 %377, %v352
    %v379 = vpop.permute.xlu0 %378
    %382 = vset.pattern.permute.xlu0 0
    %383 = vperm.xlu0 %382, %v353
    %v384 = vpop.permute.xlu0 %383
    %387 = vset.pattern.permute.xlu0 0
    %388 = vperm.xlu0 %387, %v354
    %v389 = vpop.permute.xlu0 %388
    %392 = vset.pattern.permute.xlu0 0
    %393 = vperm.xlu0 %392, %v355
    %v394 = vpop.permute.xlu0 %393
    %397 = vset.pattern.permute.xlu0 0
    %398 = vperm.xlu0 %397, %v356
    %v399 = vpop.permute.xlu0 %398
    %402 = vset.pattern.permute.xlu0 0
    %403 = vperm.xlu0 %402, %v357
    %v404 = vpop.permute.xlu0 %403
    %407 = vset.pattern.permute.xlu0 0
    %408 = vperm.xlu0 %407, %v358
    %v409 = vpop.permute.xlu0 %408
    %412 = vset.pattern.permute.xlu0 0
    %413 = vperm.xlu0 %412, %v359
    %v414 = vpop.permute.xlu0 %413
    %417 = vset.pattern.permute.xlu0 0
    %418 = vperm.xlu0 %417, %v360
    %v419 = vpop.permute.xlu0 %418
    %422 = vset.pattern.permute.xlu0 0
    %423 = vperm.xlu0 %422, %v361
    %v424 = vpop.permute.xlu0 %423
    %427 = vset.pattern.permute.xlu0 0
    %428 = vperm.xlu0 %427, %v362
    %v429 = vpop.permute.xlu0 %428
    %432 = vset.pattern.permute.xlu0 0
    %433 = vperm.xlu0 %432, %v363
    %v434 = vpop.permute.xlu0 %433
    %437 = vset.pattern.permute.xlu0 0
    %438 = vperm.xlu0 %437, %v364
    %v439 = vpop.permute.xlu0 %438
    %442 = vset.pattern.permute.xlu0 0
    %443 = vperm.xlu0 %442, %v365
    %v444 = vpop.permute.xlu0 %443
    %v462 = vunpack.c.l.b16 %v326
    %v463 = vunpack.c.l.b16 %v327
    %v464 = vunpack.c.l.b16 %v328
    %v465 = vunpack.c.l.b16 %v329
    %v466 = vunpack.c.l.b16 %v330
    %v467 = vunpack.c.l.b16 %v331
    %v468 = vunpack.c.l.b16 %v332
    %v469 = vunpack.c.l.b16 %v333
    %v470 = vunpack.c.l.b16 %v334
    %v471 = vunpack.c.l.b16 %v335
    %v472 = vunpack.c.l.b16 %v336
    %v473 = vunpack.c.l.b16 %v337
    %v474 = vunpack.c.l.b16 %v338
    %v475 = vunpack.c.l.b16 %v339
    %v476 = vunpack.c.l.b16 %v340
    %v477 = vunpack.c.l.b16 %v341
    %v478 = vpack.c.b16 %v463, %v462
    %v479 = vpack.c.b16 %v465, %v464
    %v480 = vpack.c.b16 %v467, %v466
    %v481 = vpack.c.b16 %v469, %v468
    %v482 = vpack.c.b16 %v471, %v470
    %v483 = vpack.c.b16 %v473, %v472
    %v484 = vpack.c.b16 %v475, %v474
    %v485 = vpack.c.b16 %v477, %v476
    %494 = vmatprep.subr.bf16.mxu0 0
    %495 = vmatpush1.bf16.msra.mxu0 %v349
    %496 = vmatprep.subr.bf16.mxu0 0
    %497 = vmatpush1.bf16.msra.mxu0 %v348
    %498 = vmatprep.subr.bf16.mxu0 0
    %499 = vmatpush1.bf16.msra.mxu0 %v347
    %500 = vmatprep.subr.bf16.mxu0 0
    %501 = vmatpush1.bf16.msra.mxu0 %v346
    %502 = vmatprep.subr.bf16.mxu0 0
    %503 = vmatpush1.bf16.msra.mxu0 %v345
    %504 = vmatprep.subr.bf16.mxu0 0
    %505 = vmatpush1.bf16.msra.mxu0 %v344
    %506 = vmatprep.subr.bf16.mxu0 0
    %507 = vmatpush1.bf16.msra.mxu0 %v343
    %508 = vmatprep.subr.bf16.mxu0 0
    %509 = vmatpush1.bf16.msra.mxu0 %v342
    %510 = vmatprep.subr.bf16.mxu0 0
    %511 = vmatpush2.bf16.msra.mxu0 0
    %512 = vmatprep.subr.bf16.mxu0 0
    %513 = vmatpush2.bf16.msra.mxu0 0
    %514 = vmatprep.subr.bf16.mxu0 0
    %515 = vmatpush2.bf16.msra.mxu0 0
    %516 = vmatprep.subr.bf16.mxu0 0
    %517 = vmatpush2.bf16.msra.mxu0 0
    %518 = vmatprep.subr.bf16.mxu0 0
    %519 = vmatpush2.bf16.msra.mxu0 0
    %520 = vmatprep.subr.bf16.mxu0 0
    %521 = vmatpush2.bf16.msra.mxu0 0
    %522 = vmatprep.subr.bf16.mxu0 0
    %523 = vmatpush2.bf16.msra.mxu0 0
    %524 = vmatprep.subr.bf16.mxu0 0
    %525 = vmatpush2.bf16.msra.mxu0 0
    %526 = vmatprep.mubr.bf16.mxu0 0
    %527 = vmatmul.mubr.bf16.gmra.mxu0 %v478
    %v528 = vpop.f32.mrf.mxu0
    %v529 = vadd.f32 %v369, %v528
    %v530 = vpop.f32.mrf.mxu0
    %v531 = vpop.f32.mrf.mxu0
    %v532 = vadd.f32 %v374, %v531
    %v533 = vpop.f32.mrf.mxu0
    %534 = vmatprep.mubr.bf16.mxu0 0
    %535 = vmatmul.mubr.bf16.gmra.mxu0 %v479
    %v536 = vpop.f32.mrf.mxu0
    %v537 = vadd.f32 %v379, %v536
    %v538 = vpop.f32.mrf.mxu0
    %v539 = vpop.f32.mrf.mxu0
    %v540 = vadd.f32 %v384, %v539
    %v541 = vpop.f32.mrf.mxu0
    %542 = vmatprep.mubr.bf16.mxu0 0
    %543 = vmatmul.mubr.bf16.gmra.mxu0 %v480
    %v544 = vpop.f32.mrf.mxu0
    %v545 = vadd.f32 %v389, %v544
    %v546 = vpop.f32.mrf.mxu0
    %v547 = vpop.f32.mrf.mxu0
    %v548 = vadd.f32 %v394, %v547
    %v549 = vpop.f32.mrf.mxu0
    %550 = vmatprep.mubr.bf16.mxu0 0
    %551 = vmatmul.mubr.bf16.gmra.mxu0 %v481
    %v552 = vpop.f32.mrf.mxu0
    %v553 = vadd.f32 %v399, %v552
    %v554 = vpop.f32.mrf.mxu0
    %v555 = vpop.f32.mrf.mxu0
    %v556 = vadd.f32 %v404, %v555
    %v557 = vpop.f32.mrf.mxu0
    %558 = vmatprep.mubr.bf16.mxu0 0
    %559 = vmatmul.mubr.bf16.gmra.mxu0 %v482
    %v560 = vpop.f32.mrf.mxu0
    %v561 = vadd.f32 %v409, %v560
    %v562 = vpop.f32.mrf.mxu0
    %v563 = vpop.f32.mrf.mxu0
    %v564 = vadd.f32 %v414, %v563
    %v565 = vpop.f32.mrf.mxu0
    %566 = vmatprep.mubr.bf16.mxu0 0
    %567 = vmatmul.mubr.bf16.gmra.mxu0 %v483
    %v568 = vpop.f32.mrf.mxu0
    %v569 = vadd.f32 %v419, %v568
    %v570 = vpop.f32.mrf.mxu0
    %v571 = vpop.f32.mrf.mxu0
    %v572 = vadd.f32 %v424, %v571
    %v573 = vpop.f32.mrf.mxu0
    %574 = vmatprep.mubr.bf16.mxu0 0
    %575 = vmatmul.mubr.bf16.gmra.mxu0 %v484
    %v576 = vpop.f32.mrf.mxu0
    %v577 = vadd.f32 %v429, %v576
    %v578 = vpop.f32.mrf.mxu0
    %v579 = vpop.f32.mrf.mxu0
    %v580 = vadd.f32 %v434, %v579
    %v581 = vpop.f32.mrf.mxu0
    %582 = vmatprep.mubr.bf16.mxu0 0
    %583 = vmatmul.mubr.bf16.gmra.mxu0 %v485
    %v584 = vpop.f32.mrf.mxu0
    %v585 = vadd.f32 %v439, %v584
    %v586 = vpop.f32.mrf.mxu0
    %v587 = vpop.f32.mrf.mxu0
    %v588 = vadd.f32 %v444, %v587
    %v589 = vpop.f32.mrf.mxu0
    %590 = vdwg.mxu0
    %v591 = vmax.f32 %v529, 0.0
    %v592 = vmax.f32 %v532, 0.0
    %v593 = vmax.f32 %v537, 0.0
    %v594 = vmax.f32 %v540, 0.0
    %v595 = vmax.f32 %v545, 0.0
    %v596 = vmax.f32 %v548, 0.0
    %v597 = vmax.f32 %v553, 0.0
    %v598 = vmax.f32 %v556, 0.0
    %v599 = vmax.f32 %v561, 0.0
    %v600 = vmax.f32 %v564, 0.0
    %v601 = vmax.f32 %v569, 0.0
    %v602 = vmax.f32 %v572, 0.0
    %v603 = vmax.f32 %v577, 0.0
    %v604 = vmax.f32 %v580, 0.0
    %v605 = vmax.f32 %v585, 0.0
    %v606 = vmax.f32 %v588, 0.0
    %v607 = vld [vmem:[%s5] sm:$0xf]
    %v608 = vpack.c.bf16 %v592, %v591
    %v609 = vpack.c.bf16 %v594, %v593
    %v610 = vpack.c.bf16 %v596, %v595
    %v611 = vpack.c.bf16 %v598, %v597
    %v612 = vpack.c.bf16 %v600, %v599
    %v613 = vpack.c.bf16 %v602, %v601
    %v614 = vpack.c.bf16 %v604, %v603
    %v615 = vpack.c.bf16 %v606, %v605
    %v616 = vld [vmem:[%s6] sm:$0xff]
    %618 = vset.pattern.permute.xlu0 0
    %619 = vperm.xlu0 %618, %v616
    %v620 = vpop.permute.xlu0 %619
    %622 = vmatprep.subr.bf16.mxu0 0
    %623 = vmatpush1.bf16.msra.mxu0 %v615
    %624 = vmatprep.subr.bf16.mxu0 0
    %625 = vmatpush1.bf16.msra.mxu0 %v614
    %626 = vmatprep.subr.bf16.mxu0 0
    %627 = vmatpush1.bf16.msra.mxu0 %v613
    %628 = vmatprep.subr.bf16.mxu0 0
    %629 = vmatpush1.bf16.msra.mxu0 %v612
    %630 = vmatprep.subr.bf16.mxu0 0
    %631 = vmatpush1.bf16.msra.mxu0 %v611
    %632 = vmatprep.subr.bf16.mxu0 0
    %633 = vmatpush1.bf16.msra.mxu0 %v610
    %634 = vmatprep.subr.bf16.mxu0 0
    %635 = vmatpush1.bf16.msra.mxu0 %v609
    %636 = vmatprep.subr.bf16.mxu0 0
    %637 = vmatpush1.bf16.msra.mxu0 %v608
    %638 = vmatprep.subr.bf16.mxu0 0
    %639 = vmatpush2.bf16.msra.mxu0 0
    %640 = vmatprep.subr.bf16.mxu0 0
    %641 = vmatpush2.bf16.msra.mxu0 0
    %642 = vmatprep.subr.bf16.mxu0 0
    %643 = vmatpush2.bf16.msra.mxu0 0
    %644 = vmatprep.subr.bf16.mxu0 0
    %645 = vmatpush2.bf16.msra.mxu0 0
    %646 = vmatprep.subr.bf16.mxu0 0
    %647 = vmatpush2.bf16.msra.mxu0 0
    %648 = vmatprep.subr.bf16.mxu0 0
    %649 = vmatpush2.bf16.msra.mxu0 0
    %650 = vmatprep.subr.bf16.mxu0 0
    %651 = vmatpush2.bf16.msra.mxu0 0
    %652 = vmatprep.subr.bf16.mxu0 0
    %653 = vmatpush2.bf16.msra.mxu0 0
    %654 = vmatprep.mubr.bf16.mxu0 0
    %655 = vmatmul.mubr.bf16.gmra.mxu0 %v607
    %v656 = vpop.f32.mrf.mxu0
    %v657 = vadd.f32 %v620, %v656
    %v658 = vpop.f32.mrf.mxu0
    %v659 = vpop.f32.mrf.mxu0
    %v660 = vpop.f32.mrf.mxu0
    %661 = vdwg.mxu0
    %662 = vst [vmem:[#allocation2] sm:$0xff] %v657
    // Predicated region
    $region30: #{tpu_custom_call.1} parent=1 // pred_check
      _
    $region31: #{tpu_custom_call.1} parent=1 // pred_check_branch
      %664 = sbr.rel (0) target = $region33
    $region32: #{tpu_custom_call.1} parent=1 // pred_region
      %s666 = ssub.s32 128, 128
      %667 = vsyncadd [#allocation3], %s666
      %s669 = sshll.u32 [#allocation2], 4
      %s670 = int_to_ptr.vmem [resolvable:$true] %s669
      %672 = dma.vmem_to_hbm [thread:$0]  %s670, 128, %s7, [#allocation3]
    $region33: #{tpu_custom_call.1} parent=1 // pred_fallthru
      _
    // Predicated region
    $region34: #{tpu_custom_call.1} parent=1 // pred_check
      _
    $region35: #{tpu_custom_call.1} parent=1 // pred_check_branch
      %674 = sbr.rel (0) target = $region37
    $region36: #{tpu_custom_call.1} parent=1 // pred_region
      %675 = dma.done [#allocation3], 128
    $region37: #{tpu_custom_call.1} parent=1 // pred_fallthru
      _
    %676 = vsyncpa [#allocation3], 1

</llo_original>
